<compile_context>
chip_gen: v6e
topology: v6e:2x2x1
jax: 0.10.0
libtpu: 0.0.40
codegen_flags: <defaults>
</compile_context>

<pallas_src>
import functools

import jax
import jax.numpy as jnp
from jax.experimental import pallas as pl
from jax.experimental.pallas import tpu as pltpu

IMAGENET_MEAN = jnp.array([0.485, 0.456, 0.406], jnp.float32)
IMAGENET_STD = jnp.array([0.229, 0.224, 0.225], jnp.float32)

# VGG19 features[:30] with MaxPool replaced by AvgPool:
#   13 conv(+ReLU) layers, 4 pools. Integers = conv output channels, "P" = pool.
VGG19_CFG = [64, 64, "P", 128, 128, "P", 256, 256, 256, 256, "P",
             512, 512, 512, 512, "P", 512]

_W_ALIGN = 16                        # width padding (bf16 sublane-pair friendly)
_LHS_BUDGET_BYTES = 8 * 1024 * 1024  # cap for the in-kernel (2*TH*W, 9*Cin) bf16 LHS


def _round_up(v, m):
    return ((v + m - 1) // m) * m


def _pick_tile_rows(h, wp, k_dim, cap):
    """Largest divisor of h (<= cap) keeping the in-kernel im2col LHS in budget."""
    budget = max(1, _LHS_BUDGET_BYTES // max(1, 2 * wp * k_dim * 2))
    limit = max(1, min(cap, budget))
    best = 1
    for d in range(1, h + 1):
        if h % d == 0 and d <= limit:
            best = d
    return best


# ----------------------------------------------------------------------------
# Pallas kernel: fused conv + bias + ReLU (both streams) + squared-diff sum
# ----------------------------------------------------------------------------
def _conv_relu_mse_kernel(win_ref, w_ref, b_ref, feat_ref, ss_ref, lhs_ref, *,
                          th, wp, w_real, cin, cout, ksize):
    # win_ref : (2, th+ksize-1, wp+ksize-1, cin)  bf16  halo row tile, both streams
    # w_ref   : (ksize*ksize*cin, cout)           bf16
    # b_ref   : (1, cout)                         f32
    # feat_ref: (2, th, wp, cout)                 bf16  ReLU'd features (this tile)
    # ss_ref  : (1, 1, 8, 128)                    f32   broadcast sum((f_in - f_tg)^2)
    # lhs_ref : (2*th*wp, ksize*ksize*cin)        bf16  scratch im2col LHS
    m = 2 * th * wp
    if ksize == 1:
        # layer 1: the wrapper already im2col'd the 3-channel image to K = 27
        lhs = win_ref[...].reshape(m, cin)
    else:
        # build the 9 taps in VMEM (no HBM blow-up), one long-K LHS
        for dy in range(ksize):
            for dx in range(ksize):
                k = dy * ksize + dx
                lhs_ref[:, k * cin:(k + 1) * cin] = (
                    win_ref[:, dy:dy + th, dx:dx + wp, :].reshape(m, cin))
        lhs = lhs_ref[...]

    # single MXU matmul, K = ksize*ksize*Cin; both streams share the weight push.
    acc = jnp.dot(lhs, w_ref[...], preferred_element_type=jnp.float32)
    f = jnp.maximum(acc + b_ref[...], 0.0)                 # bias + ReLU in f32
    f = f.reshape(2, th, wp, cout)

    if wp != w_real:
        # re-zero width-padding columns: keeps them acting as conv zero padding
        # for the next layer AND keeps them out of the loss.
        col = jax.lax.broadcasted_iota(jnp.int32, (1, 1, wp, 1), 2)
        f = jnp.where(col < w_real, f, 0.0)

    d = f[0] - f[1]
    ss_ref[0, 0] = jnp.broadcast_to(jnp.sum(d * d), (8, 128))
    feat_ref[...] = f.astype(feat_ref.dtype)


def _fused_conv_layer(z, w_km, b, *, ksize, w_real, tile_rows):
    """One fused conv+ReLU+MSE layer over the stacked (2N, H, Wp, Cin) tensor.

    Returns (features (2N, H, Wp, Cout) bf16, per-sample squared-error sums (N,) f32).
    """
    n2, h, wp, cin = z.shape
    n = n2 // 2
    k_dim, cout = w_km.shape
    th = _pick_tile_rows(h, wp, k_dim, tile_rows)
    nt = h // th

    if ksize == 3:
        zp = jnp.pad(z, ((0, 0), (1, 1), (1, 1), (0, 0)))
        if nt == 1:
            win = zp                                        # (2N, h+2, wp+2, cin)
        else:
            # halo-overlapping row windows concatenated along rows:
            # row block j (size th+2) == padded rows [j*th, j*th + th + 2)
            win = jnp.concatenate(
                [zp[:, j * th:j * th + th + 2] for j in range(nt)], axis=1)
        th_in, wp_in = th + 2, wp + 2
    else:                                                   # layer 1 (pre-im2col'd)
        win = z
        th_in, wp_in = th, wp

    kern = functools.partial(_conv_relu_mse_kernel, th=th, wp=wp, w_real=w_real,
                             cin=cin, cout=cout, ksize=ksize)

    grid_spec = pltpu.PrefetchScalarGridSpec(
        num_scalar_prefetch=0,
        grid=(n, nt),
        in_specs=[
            pl.BlockSpec((2, th_in, wp_in, cin), lambda i, j: (i, j, 0, 0)),
            pl.BlockSpec((k_dim, cout), lambda i, j: (0, 0)),
            pl.BlockSpec((1, cout), lambda i, j: (0, 0)),
        ],
        out_specs=[
            pl.BlockSpec((2, th, wp, cout), lambda i, j: (i, j, 0, 0)),
            pl.BlockSpec((1, 1, 8, 128), lambda i, j: (i, j, 0, 0)),
        ],
        scratch_shapes=[pltpu.VMEM((2 * th * wp, k_dim), jnp.bfloat16)],
    )

    feat, ss = pl.pallas_call(
        kern,
        grid_spec=grid_spec,
        out_shape=(jax.ShapeDtypeStruct((n2, h, wp, cout), jnp.bfloat16),
                   jax.ShapeDtypeStruct((n, nt, 8, 128), jnp.float32)),
        compiler_params=pltpu.CompilerParams(
            # every output block is written exactly once per step, so both grid
            # axes can be sharded across TensorCores (v7x megacore).
            dimension_semantics=("parallel", "parallel"),
            # well under v7x's 64 MiB physical VMEM; plenty of room on v5e/v6e.
            vmem_limit_bytes=40 * 1024 * 1024),
    )(win, w_km, b.reshape(1, cout).astype(jnp.float32))

    return feat, ss[:, :, 0, 0].sum(axis=1)


# ----------------------------------------------------------------------------
# Glue ops
# ----------------------------------------------------------------------------
def _avg_pool_2x2(z, w_real):
    """AvgPool2x2 on the stacked bf16 feature tensor (the MaxPool replacement)."""
    # TODO(synk): fold this pool into the preceding conv kernel's epilogue to
    #             save one HBM round trip of the pre-pool feature map.
    n2, h, wp, c = z.shape
    assert h % 2 == 0 and w_real % 2 == 0
    zr = z[:, :, :w_real, :].astype(jnp.float32)
    zr = zr.reshape(n2, h // 2, 2, w_real // 2, 2, c).mean(axis=(2, 4))
    w_new = w_real // 2
    wp_new = _round_up(max(w_new, _W_ALIGN), _W_ALIGN)
    zr = jnp.pad(zr, ((0, 0), (0, 0), (0, wp_new - w_new), (0, 0)))
    return zr.astype(jnp.bfloat16), w_new


def make_vgg_params(seed=0):
    """Deterministic synthetic VGG19 conv weights (He-style init).

    Returns (kernel_params, ref_params):
      kernel_params[i] = (w: (9*Cin, Cout) bf16, b: (Cout,) f32)
      ref_params[i]    = (w: (3, 3, Cin, Cout) f32 HWIO, b: (Cout,) f32)
    The reference weights are the bf16-rounded values cast back to f32 so the
    check isolates the kernel's arithmetic (the weights are synthetic anyway).
    """
    kernel_params, ref_params = [], []
    key = jax.random.PRNGKey(seed)
    c_in = 3
    for cfg in VGG19_CFG:
        if cfg == "P":
            continue
        c_out = cfg
        key, kw, kb = jax.random.split(key, 3)
        w = jax.random.normal(kw, (3, 3, c_in, c_out), jnp.float32) \
            * jnp.sqrt(2.0 / (9.0 * c_in))
        b = jax.random.normal(kb, (c_out,), jnp.float32) * 0.01
        w_bf = w.astype(jnp.bfloat16)
        kernel_params.append((w_bf.reshape(9 * c_in, c_out), b))
        ref_params.append((w_bf.astype(jnp.float32), b))
        c_in = c_out
    return kernel_params, ref_params


def lama_perceptual_loss(input_nchw, target_nchw, kernel_params, *,
                         loss_weight=1.0, normalize_inputs=True, tile_rows=64):
    """Forward pass of LaMaPerceptualLoss (mask=None)."""
    # layout: PyTorch NCHW -> NHWC; stack (input, target) as adjacent rows so
    # one kernel block covers both streams of a sample.
    x = jnp.transpose(input_nchw, (0, 2, 3, 1)).astype(jnp.float32)
    t = jnp.transpose(target_nchw, (0, 2, 3, 1)).astype(jnp.float32)
    if normalize_inputs:
        x = (x - IMAGENET_MEAN) / IMAGENET_STD
        t = (t - IMAGENET_MEAN) / IMAGENET_STD
    n, h, w_real, _ = x.shape
    z = jnp.stack([x, t], axis=1).reshape(2 * n, h, w_real, 3)

    # pad width to a sublane-friendly multiple with zero columns
    wp = _round_up(max(w_real, _W_ALIGN), _W_ALIGN)
    if wp != w_real:
        z = jnp.pad(z, ((0, 0), (0, 0), (0, wp - w_real), (0, 0)))

    # layer 1: fold the 3x3x3 taps into K=27 with a cheap wrapper-side im2col of
    # the 3-channel image (no 3 -> 128 channel padding in the kernel).
    zp = jnp.pad(z, ((0, 0), (1, 1), (1, 1), (0, 0)))
    z = jnp.concatenate(
        [zp[:, dy:dy + h, dx:dx + wp, :] for dy in range(3) for dx in range(3)],
        axis=-1).astype(jnp.bfloat16)                       # (2N, H, Wp, 27)

    losses = []
    conv_idx = 0
    for cfg in VGG19_CFG:
        if cfg == "P":
            z, w_real = _avg_pool_2x2(z, w_real)
            h //= 2
            continue
        w_km, b = kernel_params[conv_idx]
        ksize = 1 if conv_idx == 0 else 3
        z, ss = _fused_conv_layer(z, w_km, b, ksize=ksize, w_real=w_real,
                                  tile_rows=tile_rows)
        cout = w_km.shape[1]
        # mse.mean over real (C, H, W); padded columns are zero in both streams.
        losses.append(ss / float(cout * h * w_real))
        conv_idx += 1
    return jnp.stack(losses).sum() * loss_weight


# ----------------------------------------------------------------------------
# Pure-JAX reference (for correctness check)
# ----------------------------------------------------------------------------
def reference_loss(input_nchw, target_nchw, ref_params,
                   loss_weight=1.0, normalize_inputs=True):
    x = jnp.transpose(input_nchw, (0, 2, 3, 1)).astype(jnp.float32)
    t = jnp.transpose(target_nchw, (0, 2, 3, 1)).astype(jnp.float32)
    if normalize_inputs:
        x = (x - IMAGENET_MEAN) / IMAGENET_STD
        t = (t - IMAGENET_MEAN) / IMAGENET_STD

    def conv_relu(z, w, b):
        y = jax.lax.conv_general_dilated(
            z, w, window_strides=(1, 1), padding="SAME",
            dimension_numbers=("NHWC", "HWIO", "NHWC"),
            precision=jax.lax.Precision.HIGHEST)
        return jnp.maximum(y + b, 0.0)

    def avg_pool(z):
        n_, h_, w_, c_ = z.shape
        return z.reshape(n_, h_ // 2, 2, w_ // 2, 2, c_).mean(axis=(2, 4))

    losses = []
    pi = 0
    for cfg in VGG19_CFG:
        if cfg == "P":
            x, t = avg_pool(x), avg_pool(t)
        else:
            w, b = ref_params[pi]
            pi += 1
            x, t = conv_relu(x, w, b), conv_relu(t, w, b)
            losses.append(jnp.mean((x - t) ** 2, axis=(1, 2, 3)))
    return jnp.stack(losses).sum() * loss_weight


# ----------------------------------------------------------------------------
if __name__ == "__main__":
    key = jax.random.PRNGKey(0)
    k_in, k_tg = jax.random.split(key)

    N, H, W = 2, 16, 16  # small shapes; PyTorch-style NCHW inputs with 3 channels
    input_nchw = jax.random.uniform(k_in, (N, 3, H, W), jnp.float32)
    target_nchw = jax.random.uniform(k_tg, (N, 3, H, W), jnp.float32)

    kernel_params, ref_params = make_vgg_params(seed=0)

    # tile_rows=8 so the full-resolution layers exercise the halo row-tiling.
    loss = lama_perceptual_loss(input_nchw, target_nchw, kernel_params,
                                loss_weight=1.0, normalize_inputs=True,
                                tile_rows=8)
    loss = jax.block_until_ready(loss)

    ref = jax.block_until_ready(
        reference_loss(input_nchw, target_nchw, ref_params,
                       loss_weight=1.0, normalize_inputs=True))

    rel_err = abs(float(loss) - float(ref)) / (abs(float(ref)) + 1e-8)
    assert rel_err < 3e-2, (
        f"mismatch: pallas={float(loss)} ref={float(ref)} rel={rel_err}")

    print("KERNEL_OK")
</pallas_src>

<mosaic_0001>
module attributes {stable_mosaic.version = 11 : i64} {
  func.func @_conv_relu_mse_kernel(%arg0: i32, %arg1: i32, %arg2: memref<2x8x16x27xbf16, #tpu.memory_space<vmem>>, %arg3: memref<27x64xbf16, #tpu.memory_space<vmem>>, %arg4: memref<1x64xf32, #tpu.memory_space<vmem>>, %arg5: memref<2x8x16x64xbf16, #tpu.memory_space<vmem>>, %arg6: memref<1x1x8x128xf32, #tpu.memory_space<vmem>>, %arg7: memref<256x27xbf16, #tpu.memory_space<vmem>>) attributes {dimension_semantics = [#tpu.dimension_semantics<parallel>, #tpu.dimension_semantics<parallel>], iteration_bounds = array<i64: 2, 2>, scalar_prefetch = 0 : i64, scratch_operands = 1 : i64, tpu.core_type = #tpu.core_type<tc>, window_params = [{transform_indices = @transform_0, window_bounds = array<i64: 2, 8, 16, 27>}, {pipeline_mode = #tpu.pipeline_mode<synchronous>, transform_indices = @transform_1, window_bounds = array<i64: 27, 64>}, {pipeline_mode = #tpu.pipeline_mode<synchronous>, transform_indices = @transform_2, window_bounds = array<i64: 1, 64>}, {transform_indices = @transform_3, window_bounds = array<i64: 2, 8, 16, 64>}, {transform_indices = @transform_4, window_bounds = array<i64: 1, 1, 8, 128>}]} {
    %c0 = arith.constant 0 : index
    %c0_0 = arith.constant 0 : index
    %c0_1 = arith.constant 0 : index
    %c0_2 = arith.constant 0 : index
    %0 = vector.load %arg2[%c0, %c0_0, %c0_1, %c0_2] : memref<2x8x16x27xbf16, #tpu.memory_space<vmem>>, vector<2x8x16x27xbf16>
    %1 = vector.shape_cast %0 : vector<2x8x16x27xbf16> to vector<256x27xbf16>
    %c0_3 = arith.constant 0 : index
    %c0_4 = arith.constant 0 : index
    %2 = vector.load %arg3[%c0_3, %c0_4] : memref<27x64xbf16, #tpu.memory_space<vmem>>, vector<27x64xbf16>
    %cst = arith.constant dense<0.000000e+00> : vector<256x64xf32>
    %3 = tpu.matmul %1, %2, %cst {dimension_numbers = #tpu.dot_dimension_numbers<[1], [0], [0], [1], [0, 0, 1, 1], [], []>} : vector<256x27xbf16>, vector<27x64xbf16>, vector<256x64xf32> -> vector<256x64xf32>
    %c0_5 = arith.constant 0 : index
    %c0_6 = arith.constant 0 : index
    %4 = vector.load %arg4[%c0_5, %c0_6] : memref<1x64xf32, #tpu.memory_space<vmem>>, vector<1x64xf32>
    %5 = vector.broadcast %4 : vector<1x64xf32> to vector<256x64xf32>
    %6 = arith.addf %3, %5 : vector<256x64xf32>
    %cst_7 = arith.constant 0.000000e+00 : f32
    %7 = vector.broadcast %cst_7 : f32 to vector<256x64xf32>
    %8 = arith.maximumf %6, %7 : vector<256x64xf32>
    %9 = vector.shape_cast %8 : vector<256x64xf32> to vector<2x8x16x64xf32>
    %10 = vector.extract_strided_slice %9 {offsets = [0, 0, 0, 0], sizes = [1, 8, 16, 64], strides = [1, 1, 1, 1]} : vector<2x8x16x64xf32> to vector<1x8x16x64xf32>
    %11 = vector.shape_cast %10 : vector<1x8x16x64xf32> to vector<8x16x64xf32>
    %12 = vector.extract_strided_slice %9 {offsets = [1, 0, 0, 0], sizes = [1, 8, 16, 64], strides = [1, 1, 1, 1]} : vector<2x8x16x64xf32> to vector<1x8x16x64xf32>
    %13 = vector.shape_cast %12 : vector<1x8x16x64xf32> to vector<8x16x64xf32>
    %14 = arith.subf %11, %13 : vector<8x16x64xf32>
    %15 = arith.mulf %14, %14 : vector<8x16x64xf32>
    %16 = vector.shape_cast %15 : vector<8x16x64xf32> to vector<1x8x16x64xf32>
    %cst_8 = arith.constant dense<0.000000e+00> : vector<1xf32>
    %17 = vector.multi_reduction <add>, %16, %cst_8 [1, 2, 3] : vector<1x8x16x64xf32> to vector<1xf32>
    %18 = vector.shape_cast %17 : vector<1xf32> to vector<1x1x1x1xf32>
    %19 = vector.extract %18[0, 0, 0, 0] : f32 from vector<1x1x1x1xf32>
    %20 = vector.broadcast %19 : f32 to vector<8x128xf32>
    %c0_9 = arith.constant 0 : index
    %c0_10 = arith.constant 0 : index
    %c0_11 = arith.constant 0 : index
    %c0_12 = arith.constant 0 : index
    %21 = vector.load %arg6[%c0_9, %c0_10, %c0_11, %c0_12] : memref<1x1x8x128xf32, #tpu.memory_space<vmem>>, vector<1x1x8x128xf32>
    %22 = vector.shape_cast %21 : vector<1x1x8x128xf32> to vector<8x128xf32>
    %23 = vector.shape_cast %20 : vector<8x128xf32> to vector<1x1x8x128xf32>
    tpu.vector_store %arg6[%c0_9, %c0_10, %c0_11, %c0_12], %23 {strides = array<i32>} : memref<1x1x8x128xf32, #tpu.memory_space<vmem>>, vector<1x1x8x128xf32>,
    %24 = arith.truncf %9 : vector<2x8x16x64xf32> to vector<2x8x16x64xbf16>
    %c0_13 = arith.constant 0 : index
    %c0_14 = arith.constant 0 : index
    %c0_15 = arith.constant 0 : index
    %c0_16 = arith.constant 0 : index
    %25 = vector.load %arg5[%c0_13, %c0_14, %c0_15, %c0_16] : memref<2x8x16x64xbf16, #tpu.memory_space<vmem>>, vector<2x8x16x64xbf16>
    tpu.vector_store %arg5[%c0_13, %c0_14, %c0_15, %c0_16], %24 {strides = array<i32>} : memref<2x8x16x64xbf16, #tpu.memory_space<vmem>>, vector<2x8x16x64xbf16>,
    return
  }
  func.func @transform_0(%arg0: i32, %arg1: i32) -> (i32, i32, i32, i32) {
    %c0_i32 = arith.constant 0 : i32
    %c0_i32_0 = arith.constant 0 : i32
    %c0_i32_1 = arith.constant 0 : i32
    return %arg0, %arg1, %c0_i32, %c0_i32_0 : i32, i32, i32, i32
  }
  func.func @transform_1(%arg0: i32, %arg1: i32) -> (i32, i32) {
    %c0_i32 = arith.constant 0 : i32
    %c0_i32_0 = arith.constant 0 : i32
    %c0_i32_1 = arith.constant 0 : i32
    return %c0_i32, %c0_i32_0 : i32, i32
  }
  func.func @transform_2(%arg0: i32, %arg1: i32) -> (i32, i32) {
    %c0_i32 = arith.constant 0 : i32
    %c0_i32_0 = arith.constant 0 : i32
    %c0_i32_1 = arith.constant 0 : i32
    return %c0_i32, %c0_i32_0 : i32, i32
  }
  func.func @transform_3(%arg0: i32, %arg1: i32) -> (i32, i32, i32, i32) {
    %c0_i32 = arith.constant 0 : i32
    %c0_i32_0 = arith.constant 0 : i32
    %c0_i32_1 = arith.constant 0 : i32
    return %arg0, %arg1, %c0_i32, %c0_i32_0 : i32, i32, i32, i32
  }
  func.func @transform_4(%arg0: i32, %arg1: i32) -> (i32, i32, i32, i32) {
    %c0_i32 = arith.constant 0 : i32
    %c0_i32_0 = arith.constant 0 : i32
    %c0_i32_1 = arith.constant 0 : i32
    return %arg0, %arg1, %c0_i32, %c0_i32_0 : i32, i32, i32, i32
  }
}

</mosaic_0001>

<llo_original>
// kernel: tpu_custom_call.1
$region0: #{tpu_custom_call.1}
  #allocation0 [shape = 'u32[]', space=smem, size = 0x4, offset = 0x4, fixed_abs, tag = 'smem constant byte address 0x4 - core index']
  #allocation1 [shape = 'u32[144,128]{1,0:T(1,128)}', space=vmem, size = 0x12000, scoped, tag = 'internal scratch']
  #allocation2 [shape = 'bf16[256,27]{1,0:T(8,128)(2,1)}', space=vmem, size = 0x10000, scoped, tag = 'scratch operand']
  #allocation11 [shape = 's32[]', space=sflag, size = 0x4, offset = 0, fixed_abs, tag = 'sflag constant byte address 0x0 - dummy sync flag']
  #allocation13 [shape = 's32[]', space=sflag, size = 0x4, offset = 0, fixed_abs, tag = 'sflag constant byte address 0x0 - dummy sync flag']
  %s0 = inlined_call_operand.hbm [shape: bf16[4,16,16,27], index: 0, kind: input, shape index: {}]
  %s1 = inlined_call_operand.hbm [shape: bf16[27,64], index: 1, kind: input, shape index: {}]
  %s2 = inlined_call_operand.vmem [shape: f32[1,64], index: 2, kind: input, shape index: {}]
  %s3 = inlined_call_operand.hbm [shape: bf16[4,16,16,64], index: 3, kind: output, shape index: {0}]
  %s4 = inlined_call_operand.hbm [shape: f32[2,2,8,128], index: 4, kind: output, shape index: {1}]
  %5 = xla_tuple %s3, %s4
  %s6 = sld [smem:[#allocation0]]
  $region61: #{tpu_custom_call.1} parent=0
    _
  %s8 = ssub.s32 1, %s6
  %s9 = scalar_select 0, %s8, %s6
  $region1: #{tpu_custom_call.1} parent=0
    #allocation3 [shape = 'u8[131072]{0}', space=vmem, size = 0x20000, scoped, tag = 'input window, operand 0']
    #allocation4 [shape = 's32[2]{0}', space=sflag, size = 0x8, scoped, tag = 'scoped memory for tpu_custom_call.1']
    #allocation5 [shape = 's32[2]{0}', space=sflag, size = 0x8, scoped, tag = 'scoped memory for tpu_custom_call.1']
    #allocation6 [shape = 'u8[8192]{0}', space=vmem, size = 0x2000, scoped, tag = 'input window, operand 1, single buffered']
    #allocation7 [shape = 's32[1]{0}', space=sflag, size = 0x4, scoped, tag = 'scoped memory for tpu_custom_call.1']
    #allocation8 [shape = 'u8[131072]{0}', space=vmem, size = 0x20000, scoped, tag = 'output window, operand 0']
    #allocation9 [shape = 'u8[8192]{0}', space=vmem, size = 0x2000, scoped, tag = 'output window, operand 1']
    #allocation10 [shape = 's32[2]{0}', space=sflag, size = 0x8, scoped, tag = 'scoped memory for tpu_custom_call.1']
    %10 = vsyncpa [#allocation4], 0
    %s11 = scalar_lea.sflag [#allocation4], 1
    %12 = vsyncpa %s11, 0
    %13 = vsyncpa [#allocation7], 0
    %14 = vsyncpa [#allocation5], 0
    %s15 = scalar_lea.sflag [#allocation5], 1
    %16 = vsyncpa %s15, 0
    %17 = vsyncpa [#allocation10], 0
    %s18 = scalar_lea.sflag [#allocation10], 1
    %19 = vsyncpa %s18, 0
    loop: start=0, step=1, limit=6
    $region2: #{tpu_custom_call.1} parent=1 // loop_pre_header
      _
    $region3: #{tpu_custom_call.1} parent=1 // loop_header
      %s21 = sphi 0, %s25
      %p22 = scmp.ge.s32.totalorder %s21, 6
      %s28 = sphi 0, %s40
      %s29 = sphi 0, %s36
      %s30 = sphi 0, %s28
      %s31 = sphi 0, %s29
      %s32 = sphi 0, %s30
      %s33 = sphi 0, %s31
      %s45 = sphi 0, %s47
      %s48 = sphi 0, %s45
      %s49 = sphi 0, %s48
      %s65 = sphi 0, %s49
      %s69 = sphi 0, %s69
      %s71 = sphi 0, %s69
      %s72 = sphi 0, %s71
      %s86 = sphi 0, %s72
      %s90 = sphi 0, %s90
      %s92 = sphi 0, %s90
      %s93 = sphi 0, %s92
      %s107 = sphi 0, %s93
      %s115 = sphi 0, %s117
      %s118 = sphi 0, %s115
      %s119 = sphi 0, %s118
      %s135 = sphi 0, %s119
      %s143 = sphi 0, %s145
      %s146 = sphi 0, %s143
      %s147 = sphi 0, %s146
      %s163 = sphi 0, %s147
    $region4: #{tpu_custom_call.1} parent=1 // loop_header_branch
      %24 = sbr.rel (%p22) target = $region8
    $region5: #{tpu_custom_call.1} parent=1 // loop_body
      %s26 = ssub.s32 %s21, 1
      %s27 = ssub.s32 %s21, 2
      %s34 = sadd.s32 1, %s29
      %p35 = scmp.ge.s32.totalorder %s34, 2
      %s36 = scalar_select %p35, 0, %s34
      %s37 = sadd.s32 1, %s28
      %s38 = scalar_select %p35, %s37, %s28
      %p39 = scmp.ge.s32.totalorder %s38, 2
      %s40 = scalar_select %p39, 0, %s38
      %s41 = ssub.s32 %s28, %s40
      %s42 = ssub.s32 %s29, %s36
      %s43 = sor.u32 %s41, %s42
      %p44 = scmp.eq.s32.totalorder %s43, 0
      %s46 = sadd.s32 %s45, 1
      %s47 = scalar_select %p44, %s45, %s46
      %p50 = pneg %p44
      %p51 = scmp.eq.s32.totalorder %s21, 3
      %p52 = por %p50, %p51
      %p53 = scmp.ne.s32.totalorder %s45, %s48
      %p54 = scmp.eq.s32.totalorder %s21, 0
      %p55 = por %p53, %p54
      %p56 = scmp.ne.s32.totalorder %s45, %s48
      %p57 = scmp.eq.s32.totalorder %s26, 3
      %p58 = por %p56, %p57
      %p59 = scmp.ne.s32.totalorder %s48, %s49
      %p60 = scmp.eq.s32.totalorder %s26, 0
      %p61 = por %p59, %p60
      %p62 = scmp.ne.s32.totalorder %s48, %s49
      %p63 = scmp.eq.s32.totalorder %s27, 3
      %p64 = por %p62, %p63
      %p66 = scmp.ne.s32.totalorder %s49, %s65
      %p67 = scmp.eq.s32.totalorder %s27, 0
      %p68 = por %p66, %p67
      %s70 = sadd.s32 %s69, 1
      %p73 = scmp.eq.s32.totalorder %s21, 3
      %p74 = scmp.ne.s32.totalorder %s69, %s71
      %p75 = scmp.eq.s32.totalorder %s21, 0
      %p76 = por %p74, %p75
      %p77 = scmp.ne.s32.totalorder %s69, %s71
      %p78 = scmp.eq.s32.totalorder %s26, 3
      %p79 = por %p77, %p78
      %p80 = scmp.ne.s32.totalorder %s71, %s72
      %p81 = scmp.eq.s32.totalorder %s26, 0
      %p82 = por %p80, %p81
      %p83 = scmp.ne.s32.totalorder %s71, %s72
      %p84 = scmp.eq.s32.totalorder %s27, 3
      %p85 = por %p83, %p84
      %p87 = scmp.ne.s32.totalorder %s72, %s86
      %p88 = scmp.eq.s32.totalorder %s27, 0
      %p89 = por %p87, %p88
      %s91 = sadd.s32 %s90, 1
      %p94 = scmp.eq.s32.totalorder %s21, 3
      %p95 = scmp.ne.s32.totalorder %s90, %s92
      %p96 = scmp.eq.s32.totalorder %s21, 0
      %p97 = por %p95, %p96
      %p98 = scmp.ne.s32.totalorder %s90, %s92
      %p99 = scmp.eq.s32.totalorder %s26, 3
      %p100 = por %p98, %p99
      %p101 = scmp.ne.s32.totalorder %s92, %s93
      %p102 = scmp.eq.s32.totalorder %s26, 0
      %p103 = por %p101, %p102
      %p104 = scmp.ne.s32.totalorder %s92, %s93
      %p105 = scmp.eq.s32.totalorder %s27, 3
      %p106 = por %p104, %p105
      %p108 = scmp.ne.s32.totalorder %s93, %s107
      %p109 = scmp.eq.s32.totalorder %s27, 0
      %p110 = por %p108, %p109
      %s111 = ssub.s32 %s28, %s40
      %s112 = ssub.s32 %s29, %s36
      %s113 = sor.u32 %s111, %s112
      %p114 = scmp.eq.s32.totalorder %s113, 0
      %s116 = sadd.s32 %s115, 1
      %s117 = scalar_select %p114, %s115, %s116
      %p120 = pneg %p114
      %p121 = scmp.eq.s32.totalorder %s21, 3
      %p122 = por %p120, %p121
      %p123 = scmp.ne.s32.totalorder %s115, %s118
      %p124 = scmp.eq.s32.totalorder %s21, 0
      %p125 = por %p123, %p124
      %p126 = scmp.ne.s32.totalorder %s115, %s118
      %p127 = scmp.eq.s32.totalorder %s26, 3
      %p128 = por %p126, %p127
      %p129 = scmp.ne.s32.totalorder %s118, %s119
      %p130 = scmp.eq.s32.totalorder %s26, 0
      %p131 = por %p129, %p130
      %p132 = scmp.ne.s32.totalorder %s118, %s119
      %p133 = scmp.eq.s32.totalorder %s27, 3
      %p134 = por %p132, %p133
      %p136 = scmp.ne.s32.totalorder %s119, %s135
      %p137 = scmp.eq.s32.totalorder %s27, 0
      %p138 = por %p136, %p137
      %s139 = ssub.s32 %s28, %s40
      %s140 = ssub.s32 %s29, %s36
      %s141 = sor.u32 %s139, %s140
      %p142 = scmp.eq.s32.totalorder %s141, 0
      %s144 = sadd.s32 %s143, 1
      %s145 = scalar_select %p142, %s143, %s144
      %p148 = pneg %p142
      %p149 = scmp.eq.s32.totalorder %s21, 3
      %p150 = por %p148, %p149
      %p151 = scmp.ne.s32.totalorder %s143, %s146
      %p152 = scmp.eq.s32.totalorder %s21, 0
      %p153 = por %p151, %p152
      %p154 = scmp.ne.s32.totalorder %s143, %s146
      %p155 = scmp.eq.s32.totalorder %s26, 3
      %p156 = por %p154, %p155
      %p157 = scmp.ne.s32.totalorder %s146, %s147
      %p158 = scmp.eq.s32.totalorder %s26, 0
      %p159 = por %p157, %p158
      %p160 = scmp.ne.s32.totalorder %s146, %s147
      %p161 = scmp.eq.s32.totalorder %s27, 3
      %p162 = por %p160, %p161
      %p164 = scmp.ne.s32.totalorder %s147, %s163
      %p165 = scmp.eq.s32.totalorder %s27, 0
      %p166 = por %p164, %p165
      %p167 = scmp.le.s32.totalorder 1, %s21
      %p168 = scmp.lt.s32.totalorder %s21, 5
      %p169 = pnand %p167, %p168
      %p170 = pneg %p169
      // Predicated region
      $region9: #{tpu_custom_call.1} parent=5 // pred_check
        _
      $region10: #{tpu_custom_call.1} parent=5 // pred_check_branch
        %172 = sbr.rel (%p169) target = $region12
      $region11: #{tpu_custom_call.1} parent=5 // pred_region
        %s173 = ssub.s32 %s21, 1
        // Predicated region
        $region13: #{tpu_custom_call.1} parent=11 // pred_check
          %p174 = pneg %p82
        $region14: #{tpu_custom_call.1} parent=11 // pred_check_branch
          %176 = sbr.rel (%p174) target = $region16
        $region15: #{tpu_custom_call.1} parent=11 // pred_region
          %s178 = ssub.s32 256, 256
          %179 = vsyncadd [#allocation7], %s178
          %s180 = sshll.u32 [#allocation6], 4
          %s181 = int_to_ptr.vmem [resolvable:$true] %s180
          %186 = dma.hbm_to_vmem [thread:$0]  %s1, 256, %s181, [#allocation7], 64, 64, 4
        $region16: #{tpu_custom_call.1} parent=11 // pred_fallthru
          _
        // Predicated region
        $region17: #{tpu_custom_call.1} parent=11 // pred_check
          %p187 = pneg %p103
        $region18: #{tpu_custom_call.1} parent=11 // pred_check_branch
          %189 = sbr.rel (%p187) target = $region20
        $region19: #{tpu_custom_call.1} parent=11 // pred_region
          _
        $region20: #{tpu_custom_call.1} parent=11 // pred_fallthru
          _
      $region12: #{tpu_custom_call.1} parent=5 // pred_fallthru
        _
      %p190 = scmp.lt.s32.totalorder %s21, 4
      // Predicated region
      $region21: #{tpu_custom_call.1} parent=5 // pred_check
        %p191 = pneg %p190
      $region22: #{tpu_custom_call.1} parent=5 // pred_check_branch
        %193 = sbr.rel (%p191) target = $region24
      $region23: #{tpu_custom_call.1} parent=5 // pred_region
        // Predicated region
        $region25: #{tpu_custom_call.1} parent=23 // pred_check
          %p194 = pneg %p55
        $region26: #{tpu_custom_call.1} parent=23 // pred_check_branch
          %196 = sbr.rel (%p194) target = $region28
        $region27: #{tpu_custom_call.1} parent=23 // pred_region
          #allocation12 [shape = 'u32[6]{0}', space=smem, size = 0x18, scoped, tag = 'DMA stride descriptor']
          %s197 = sand.u32 %s45, 1
          %s198 = scalar_lea.sflag [#allocation4], %s197
          %s199 = sand.u32 %s45, 1
          %s200 = smul.addr %s199, 128
          %s201 = scalar_lea.vmem [#allocation3], %s200
          %s202 = smul.u32 2, %s28
          %s203 = smul.u32 8, %s29
          %s205 = ssub.s32 2048, 2048
          %206 = vsyncadd %s198, %s205
          %s207 = smul.addr %s203, 2
          %s208 = smul.addr %s202, 32
          %s209 = sadd.s32 %s207, %s208
          %s210 = smul.addr %s209, 64
          %s211 = scalar_lea.hbm %s0, %s210
          %s213 = sshll.u32 1, 14
          %s214 = sxor.u32 4294967295, %s213
          %s216 = sld [smem:[#allocation0]]
          %s217 = sadd.s32 2, %s216
          %s219 = sshll.u32 7, 26
          %s220 = sxor.u32 4294967295, %s219
          %s221 = sand.u32 0, %s220
          %s222 = sshll.u32 %s217, 26
          %s223 = sor.u32 %s221, %s222
          %s224 = sshll.u32 %s201, 4
          %s225 = int_to_ptr.vmem [resolvable:$true] %s224
          %231 = sst [smem:[#allocation12]] 2048
          %s232 = scalar_lea.smem [#allocation12], 1
          %233 = sst [smem:[%s232]] 1024
          %s234 = scalar_lea.smem [#allocation12], 2
          %235 = sst [smem:[%s234]] 16
          %s236 = scalar_lea.smem [#allocation12], 3
          %237 = sst [smem:[%s236]] 64
          %s238 = scalar_lea.smem [#allocation12], 4
          %239 = sst [smem:[%s238]] 64
          %s240 = scalar_lea.smem [#allocation12], 5
          %241 = sst [smem:[%s240]] 4
          %243 = dma.general %s211, 2048, %s225, %s198, 131072, [#allocation12], %s223, 0
        $region28: #{tpu_custom_call.1} parent=23 // pred_fallthru
          _
      $region24: #{tpu_custom_call.1} parent=5 // pred_fallthru
        _
      %p244 = scmp.le.s32.totalorder 1, %s21
      %p245 = scmp.lt.s32.totalorder %s21, 5
      %p246 = pnand %p244, %p245
      %p247 = pneg %p246
      // Predicated region
      $region29: #{tpu_custom_call.1} parent=5 // pred_check
        _
      $region30: #{tpu_custom_call.1} parent=5 // pred_check_branch
        %249 = sbr.rel (%p246) target = $region32
      $region31: #{tpu_custom_call.1} parent=5 // pred_region
        %s250 = ssub.s32 %s21, 1
        %s251 = sand.u32 %s48, 1
        %s252 = scalar_lea.sflag [#allocation4], %s251
        %s253 = sand.u32 %s48, 1
        %s254 = smul.addr %s253, 128
        %s255 = scalar_lea.vmem [#allocation3], %s254
        // Predicated region
        $region33: #{tpu_custom_call.1} parent=31 // pred_check
          %p256 = pneg %p61
        $region34: #{tpu_custom_call.1} parent=31 // pred_check_branch
          %258 = sbr.rel (%p256) target = $region36
        $region35: #{tpu_custom_call.1} parent=31 // pred_region
          %259 = dma.done %s252, 2048
        $region36: #{tpu_custom_call.1} parent=31 // pred_fallthru
          _
        // Predicated region
        $region37: #{tpu_custom_call.1} parent=31 // pred_check
          %p260 = pneg %p82
        $region38: #{tpu_custom_call.1} parent=31 // pred_check_branch
          %262 = sbr.rel (%p260) target = $region40
        $region39: #{tpu_custom_call.1} parent=31 // pred_region
          %263 = dma.done [#allocation7], 256
        $region40: #{tpu_custom_call.1} parent=31 // pred_fallthru
          _
        %s264 = sand.u32 %s48, 1
        %s265 = scalar_lea.sflag [#allocation4], %s264
        %s266 = sand.u32 %s48, 1
        %s267 = smul.addr %s266, 128
        %s268 = scalar_lea.vmem [#allocation3], %s267
        %p269 = pneg %p61
        %p270 = pneg %p58
        %p271 = pneg %p82
        %p272 = pneg %p79
        %p273 = pneg %p103
        %p274 = pneg %p100
        %p275 = pneg %p131
        %p276 = pneg %p128
        %s277 = sand.u32 %s118, 1
        %s278 = scalar_lea.sflag [#allocation5], %s277
        %s279 = sand.u32 %s118, 1
        %s280 = smul.addr %s279, 128
        %s281 = scalar_lea.vmem [#allocation8], %s280
        %p282 = pneg %p159
        %p283 = pneg %p156
        %s284 = sand.u32 %s146, 1
        %s285 = scalar_lea.sflag [#allocation10], %s284
        %s286 = sand.u32 %s146, 1
        %s287 = smul.addr %s286, 8
        %s288 = scalar_lea.vmem [#allocation9], %s287
        %s289 = smul.u32 2, %s30
        %s290 = smul.u32 8, %s31
        %s291 = smul.u32 2, %s30
        %s292 = smul.u32 8, %s31
        %v294 = vld [vmem:[%s255] sm:$0xf]
        %v295 = vld [vmem:[%s255 + $0x4] sm:$0xf]
        %v296 = vld [vmem:[%s255 + $0x8] sm:$0xf]
        %v297 = vld [vmem:[%s255 + $0xc] sm:$0xf]
        %v298 = vld [vmem:[%s255 + $0x10] sm:$0xf]
        %v299 = vld [vmem:[%s255 + $0x14] sm:$0xf]
        %v300 = vld [vmem:[%s255 + $0x18] sm:$0xf]
        %v301 = vld [vmem:[%s255 + $0x1c] sm:$0xf]
        %v302 = vld [vmem:[%s255 + $0x20] sm:$0xf]
        %v303 = vld [vmem:[%s255 + $0x24] sm:$0xf]
        %v304 = vld [vmem:[%s255 + $0x28] sm:$0xf]
        %v305 = vld [vmem:[%s255 + $0x2c] sm:$0xf]
        %v306 = vld [vmem:[%s255 + $0x30] sm:$0xf]
        %v307 = vld [vmem:[%s255 + $0x34] sm:$0xf]
        %v308 = vld [vmem:[%s255 + $0x38] sm:$0xf]
        %v309 = vld [vmem:[%s255 + $0x3c] sm:$0xf]
        %v310 = vld [vmem:[%s255 + $0x40] sm:$0xf]
        %v311 = vld [vmem:[%s255 + $0x44] sm:$0xf]
        %v312 = vld [vmem:[%s255 + $0x48] sm:$0xf]
        %v313 = vld [vmem:[%s255 + $0x4c] sm:$0xf]
        %v314 = vld [vmem:[%s255 + $0x50] sm:$0xf]
        %v315 = vld [vmem:[%s255 + $0x54] sm:$0xf]
        %v316 = vld [vmem:[%s255 + $0x58] sm:$0xf]
        %v317 = vld [vmem:[%s255 + $0x5c] sm:$0xf]
        %v318 = vld [vmem:[%s255 + $0x60] sm:$0xf]
        %v319 = vld [vmem:[%s255 + $0x64] sm:$0xf]
        %v320 = vld [vmem:[%s255 + $0x68] sm:$0xf]
        %v321 = vld [vmem:[%s255 + $0x6c] sm:$0xf]
        %v322 = vld [vmem:[%s255 + $0x70] sm:$0xf]
        %v323 = vld [vmem:[%s255 + $0x74] sm:$0xf]
        %v324 = vld [vmem:[%s255 + $0x78] sm:$0xf]
        %v325 = vld [vmem:[%s255 + $0x7c] sm:$0xf]
        %v326 = vld [vmem:[#allocation6] sm:$0xf]
        %v327 = vld [vmem:[#allocation6 + $0x4] sm:$0xf]
        %v328 = vld [vmem:[#allocation6 + $0x8] sm:$0xf]
        %v329 = vld [vmem:[#allocation6 + $0xc] sm:$0x3]
        %v330 = vld [vmem:[%s2] sm:$0x1]
        %v332 = vlaneseq
        %v333 = vshrl.u32 %v332, 7
        %v334 = vsub.s32 0, %v333
        %v335 = vrot.slane %v330, %v334
        %v369 = vunpack.c.l.b16 %v294
        %v370 = vunpack.c.l.b16 %v295
        %v371 = vunpack.c.l.b16 %v296
        %v372 = vunpack.c.l.b16 %v297
        %v373 = vunpack.c.l.b16 %v298
        %v374 = vunpack.c.l.b16 %v299
        %v375 = vunpack.c.l.b16 %v300
        %v376 = vunpack.c.l.b16 %v301
        %v377 = vunpack.c.l.b16 %v302
        %v378 = vunpack.c.l.b16 %v303
        %v379 = vunpack.c.l.b16 %v304
        %v380 = vunpack.c.l.b16 %v305
        %v381 = vunpack.c.l.b16 %v306
        %v382 = vunpack.c.l.b16 %v307
        %v383 = vunpack.c.l.b16 %v308
        %v384 = vunpack.c.l.b16 %v309
        %v385 = vunpack.c.l.b16 %v310
        %v386 = vunpack.c.l.b16 %v311
        %v387 = vunpack.c.l.b16 %v312
        %v388 = vunpack.c.l.b16 %v313
        %v389 = vunpack.c.l.b16 %v314
        %v390 = vunpack.c.l.b16 %v315
        %v391 = vunpack.c.l.b16 %v316
        %v392 = vunpack.c.l.b16 %v317
        %v393 = vunpack.c.l.b16 %v318
        %v394 = vunpack.c.l.b16 %v319
        %v395 = vunpack.c.l.b16 %v320
        %v396 = vunpack.c.l.b16 %v321
        %v397 = vunpack.c.l.b16 %v322
        %v398 = vunpack.c.l.b16 %v323
        %v399 = vunpack.c.l.b16 %v324
        %v400 = vunpack.c.l.b16 %v325
        %v401 = vpack.c.b16 %v370, %v369
        %v402 = vpack.c.b16 %v372, %v371
        %v403 = vpack.c.b16 %v374, %v373
        %v404 = vpack.c.b16 %v376, %v375
        %v405 = vpack.c.b16 %v378, %v377
        %v406 = vpack.c.b16 %v380, %v379
        %v407 = vpack.c.b16 %v382, %v381
        %v408 = vpack.c.b16 %v384, %v383
        %v409 = vpack.c.b16 %v386, %v385
        %v410 = vpack.c.b16 %v388, %v387
        %v411 = vpack.c.b16 %v390, %v389
        %v412 = vpack.c.b16 %v392, %v391
        %v413 = vpack.c.b16 %v394, %v393
        %v414 = vpack.c.b16 %v396, %v395
        %v415 = vpack.c.b16 %v398, %v397
        %v416 = vpack.c.b16 %v400, %v399
        %v421 = vunpack.c.l.b16 %v326
        %v422 = vunpack.c.l.b16 %v327
        %v423 = vunpack.c.l.b16 %v328
        %v424 = vunpack.c.l.b16 %v329
        %v425 = vpack.c.b16 %v422, %v421
        %v426 = vpack.c.b16 %v424, %v423
        %vm428 = vcmask 220160
        %v430 = vsel %vm428, %v401, 0
        %v433 = vsel %vm428, %v402, 0
        %v436 = vsel %vm428, %v403, 0
        %v439 = vsel %vm428, %v404, 0
        %v442 = vsel %vm428, %v405, 0
        %v445 = vsel %vm428, %v406, 0
        %v448 = vsel %vm428, %v407, 0
        %v451 = vsel %vm428, %v408, 0
        %v454 = vsel %vm428, %v409, 0
        %v457 = vsel %vm428, %v410, 0
        %v460 = vsel %vm428, %v411, 0
        %v463 = vsel %vm428, %v412, 0
        %v466 = vsel %vm428, %v413, 0
        %v469 = vsel %vm428, %v414, 0
        %v472 = vsel %vm428, %v415, 0
        %v475 = vsel %vm428, %v416, 0
        %vm477 = vcmask 1044480
        %vm478 = vcmask 1045504
        %v479 = vsel %vm477, 4294967295, 65535
        %v480 = vsel %vm478, %v479, 0
        %v482 = vand.u32 %v426, %v480
        %484 = vmatprep.subr.bf16.mxu0 0
        %485 = vmatpush1.bf16.msra.mxu0 0
        %486 = vmatprep.subr.bf16.mxu0 0
        %487 = vmatpush1.bf16.msra.mxu0 0
        %488 = vmatprep.subr.bf16.mxu0 0
        %489 = vmatpush1.bf16.msra.mxu0 0
        %490 = vmatprep.subr.bf16.mxu0 0
        %491 = vmatpush1.bf16.msra.mxu0 0
        %492 = vmatprep.subr.bf16.mxu0 0
        %493 = vmatpush1.bf16.msra.mxu0 0
        %494 = vmatprep.subr.bf16.mxu0 0
        %495 = vmatpush1.bf16.msra.mxu0 0
        %496 = vmatprep.subr.bf16.mxu0 0
        %497 = vmatpush1.bf16.msra.mxu0 %v482
        %498 = vmatprep.subr.bf16.mxu0 0
        %499 = vmatpush1.bf16.msra.mxu0 %v425
        %500 = vmatprep.subr.bf16.mxu0 0
        %501 = vmatpush2.bf16.msra.mxu0 0
        %502 = vmatprep.subr.bf16.mxu0 0
        %503 = vmatpush2.bf16.msra.mxu0 0
        %504 = vmatprep.subr.bf16.mxu0 0
        %505 = vmatpush2.bf16.msra.mxu0 0
        %506 = vmatprep.subr.bf16.mxu0 0
        %507 = vmatpush2.bf16.msra.mxu0 0
        %508 = vmatprep.subr.bf16.mxu0 0
        %509 = vmatpush2.bf16.msra.mxu0 0
        %510 = vmatprep.subr.bf16.mxu0 0
        %511 = vmatpush2.bf16.msra.mxu0 0
        %512 = vmatprep.subr.bf16.mxu0 0
        %513 = vmatpush2.bf16.msra.mxu0 0
        %514 = vmatprep.subr.bf16.mxu0 0
        %515 = vmatpush2.bf16.msra.mxu0 0
        %516 = vmatprep.mubr.bf16.mxu0 0
        %517 = vmatmul.mubr.bf16.gmra.mxu0 %v430
        %v518 = vpop.f32.mrf.mxu0
        %v519 = vadd.f32 %v335, %v518
        %v520 = vpop.f32.mrf.mxu0
        %v521 = vpop.f32.mrf.mxu0
        %v522 = vadd.f32 %v335, %v521
        %v523 = vpop.f32.mrf.mxu0
        %524 = vmatprep.mubr.bf16.mxu0 0
        %525 = vmatmul.mubr.bf16.gmra.mxu0 %v433
        %v526 = vpop.f32.mrf.mxu0
        %v527 = vadd.f32 %v335, %v526
        %v528 = vpop.f32.mrf.mxu0
        %v529 = vpop.f32.mrf.mxu0
        %v530 = vadd.f32 %v335, %v529
        %v531 = vpop.f32.mrf.mxu0
        %532 = vmatprep.mubr.bf16.mxu0 0
        %533 = vmatmul.mubr.bf16.gmra.mxu0 %v436
        %v534 = vpop.f32.mrf.mxu0
        %v535 = vadd.f32 %v335, %v534
        %v536 = vpop.f32.mrf.mxu0
        %v537 = vpop.f32.mrf.mxu0
        %v538 = vadd.f32 %v335, %v537
        %v539 = vpop.f32.mrf.mxu0
        %540 = vmatprep.mubr.bf16.mxu0 0
        %541 = vmatmul.mubr.bf16.gmra.mxu0 %v439
        %v542 = vpop.f32.mrf.mxu0
        %v543 = vadd.f32 %v335, %v542
        %v544 = vpop.f32.mrf.mxu0
        %v545 = vpop.f32.mrf.mxu0
        %v546 = vadd.f32 %v335, %v545
        %v547 = vpop.f32.mrf.mxu0
        %548 = vmatprep.mubr.bf16.mxu0 0
        %549 = vmatmul.mubr.bf16.gmra.mxu0 %v442
        %v550 = vpop.f32.mrf.mxu0
        %v551 = vadd.f32 %v335, %v550
        %v552 = vpop.f32.mrf.mxu0
        %v553 = vpop.f32.mrf.mxu0
        %v554 = vadd.f32 %v335, %v553
        %v555 = vpop.f32.mrf.mxu0
        %556 = vmatprep.mubr.bf16.mxu0 0
        %557 = vmatmul.mubr.bf16.gmra.mxu0 %v445
        %v558 = vpop.f32.mrf.mxu0
        %v559 = vadd.f32 %v335, %v558
        %v560 = vpop.f32.mrf.mxu0
        %v561 = vpop.f32.mrf.mxu0
        %v562 = vadd.f32 %v335, %v561
        %v563 = vpop.f32.mrf.mxu0
        %564 = vmatprep.mubr.bf16.mxu0 0
        %565 = vmatmul.mubr.bf16.gmra.mxu0 %v448
        %v566 = vpop.f32.mrf.mxu0
        %v567 = vadd.f32 %v335, %v566
        %v568 = vpop.f32.mrf.mxu0
        %v569 = vpop.f32.mrf.mxu0
        %v570 = vadd.f32 %v335, %v569
        %v571 = vpop.f32.mrf.mxu0
        %572 = vmatprep.mubr.bf16.mxu0 0
        %573 = vmatmul.mubr.bf16.gmra.mxu0 %v451
        %v574 = vpop.f32.mrf.mxu0
        %v575 = vadd.f32 %v335, %v574
        %v576 = vpop.f32.mrf.mxu0
        %v577 = vpop.f32.mrf.mxu0
        %v578 = vadd.f32 %v335, %v577
        %v579 = vpop.f32.mrf.mxu0
        %580 = vmatprep.mubr.bf16.mxu0 0
        %581 = vmatmul.mubr.bf16.gmra.mxu0 %v454
        %v582 = vpop.f32.mrf.mxu0
        %v583 = vadd.f32 %v335, %v582
        %v584 = vpop.f32.mrf.mxu0
        %v585 = vpop.f32.mrf.mxu0
        %v586 = vadd.f32 %v335, %v585
        %v587 = vpop.f32.mrf.mxu0
        %588 = vmatprep.mubr.bf16.mxu0 0
        %589 = vmatmul.mubr.bf16.gmra.mxu0 %v457
        %v590 = vpop.f32.mrf.mxu0
        %v591 = vadd.f32 %v335, %v590
        %v592 = vpop.f32.mrf.mxu0
        %v593 = vpop.f32.mrf.mxu0
        %v594 = vadd.f32 %v335, %v593
        %v595 = vpop.f32.mrf.mxu0
        %596 = vmatprep.mubr.bf16.mxu0 0
        %597 = vmatmul.mubr.bf16.gmra.mxu0 %v460
        %v598 = vpop.f32.mrf.mxu0
        %v599 = vadd.f32 %v335, %v598
        %v600 = vpop.f32.mrf.mxu0
        %v601 = vpop.f32.mrf.mxu0
        %v602 = vadd.f32 %v335, %v601
        %v603 = vpop.f32.mrf.mxu0
        %604 = vmatprep.mubr.bf16.mxu0 0
        %605 = vmatmul.mubr.bf16.gmra.mxu0 %v463
        %v606 = vpop.f32.mrf.mxu0
        %v607 = vadd.f32 %v335, %v606
        %v608 = vpop.f32.mrf.mxu0
        %v609 = vpop.f32.mrf.mxu0
        %v610 = vadd.f32 %v335, %v609
        %v611 = vpop.f32.mrf.mxu0
        %612 = vmatprep.mubr.bf16.mxu0 0
        %613 = vmatmul.mubr.bf16.gmra.mxu0 %v466
        %v614 = vpop.f32.mrf.mxu0
        %v615 = vadd.f32 %v335, %v614
        %v616 = vpop.f32.mrf.mxu0
        %v617 = vpop.f32.mrf.mxu0
        %v618 = vadd.f32 %v335, %v617
        %v619 = vpop.f32.mrf.mxu0
        %620 = vmatprep.mubr.bf16.mxu0 0
        %621 = vmatmul.mubr.bf16.gmra.mxu0 %v469
        %v622 = vpop.f32.mrf.mxu0
        %v623 = vadd.f32 %v335, %v622
        %v624 = vpop.f32.mrf.mxu0
        %v625 = vpop.f32.mrf.mxu0
        %v626 = vadd.f32 %v335, %v625
        %v627 = vpop.f32.mrf.mxu0
        %628 = vmatprep.mubr.bf16.mxu0 0
        %629 = vmatmul.mubr.bf16.gmra.mxu0 %v472
        %v630 = vpop.f32.mrf.mxu0
        %v631 = vadd.f32 %v335, %v630
        %v632 = vpop.f32.mrf.mxu0
        %v633 = vpop.f32.mrf.mxu0
        %v634 = vadd.f32 %v335, %v633
        %v635 = vpop.f32.mrf.mxu0
        %636 = vmatprep.mubr.bf16.mxu0 0
        %637 = vmatmul.mubr.bf16.gmra.mxu0 %v475
        %v638 = vpop.f32.mrf.mxu0
        %v639 = vadd.f32 %v335, %v638
        %v640 = vpop.f32.mrf.mxu0
        %v641 = vpop.f32.mrf.mxu0
        %v642 = vadd.f32 %v335, %v641
        %v643 = vpop.f32.mrf.mxu0
        %644 = vdwg.mxu0
        %v645 = vmax.f32 %v519, 0.0
        %v646 = vmax.f32 %v522, 0.0
        %v647 = vmax.f32 %v527, 0.0
        %v648 = vmax.f32 %v530, 0.0
        %v649 = vmax.f32 %v535, 0.0
        %v650 = vmax.f32 %v538, 0.0
        %v651 = vmax.f32 %v543, 0.0
        %v652 = vmax.f32 %v546, 0.0
        %v653 = vmax.f32 %v551, 0.0
        %v654 = vmax.f32 %v554, 0.0
        %v655 = vmax.f32 %v559, 0.0
        %v656 = vmax.f32 %v562, 0.0
        %v657 = vmax.f32 %v567, 0.0
        %v658 = vmax.f32 %v570, 0.0
        %v659 = vmax.f32 %v575, 0.0
        %v660 = vmax.f32 %v578, 0.0
        %v661 = vmax.f32 %v583, 0.0
        %v662 = vmax.f32 %v586, 0.0
        %v663 = vmax.f32 %v591, 0.0
        %v664 = vmax.f32 %v594, 0.0
        %v665 = vmax.f32 %v599, 0.0
        %v666 = vmax.f32 %v602, 0.0
        %v667 = vmax.f32 %v607, 0.0
        %v668 = vmax.f32 %v610, 0.0
        %v669 = vmax.f32 %v615, 0.0
        %v670 = vmax.f32 %v618, 0.0
        %v671 = vmax.f32 %v623, 0.0
        %v672 = vmax.f32 %v626, 0.0
        %v673 = vmax.f32 %v631, 0.0
        %v674 = vmax.f32 %v634, 0.0
        %v675 = vmax.f32 %v639, 0.0
        %v676 = vmax.f32 %v642, 0.0
        %v677 = vsub.f32 %v645, %v661
        %v678 = vsub.f32 %v646, %v662
        %v679 = vsub.f32 %v647, %v663
        %v680 = vsub.f32 %v648, %v664
        %v681 = vsub.f32 %v649, %v665
        %v682 = vsub.f32 %v650, %v666
        %v683 = vsub.f32 %v651, %v667
        %v684 = vsub.f32 %v652, %v668
        %v685 = vsub.f32 %v653, %v669
        %v686 = vsub.f32 %v654, %v670
        %v687 = vsub.f32 %v655, %v671
        %v688 = vsub.f32 %v656, %v672
        %v689 = vsub.f32 %v657, %v673
        %v690 = vsub.f32 %v658, %v674
        %v691 = vsub.f32 %v659, %v675
        %v692 = vsub.f32 %v660, %v676
        %v693 = vmul.f32 %v677, %v677
        %v694 = vmul.f32 %v678, %v678
        %v695 = vmul.f32 %v679, %v679
        %v696 = vmul.f32 %v680, %v680
        %v697 = vmul.f32 %v681, %v681
        %v698 = vmul.f32 %v682, %v682
        %v699 = vmul.f32 %v683, %v683
        %v700 = vmul.f32 %v684, %v684
        %v701 = vmul.f32 %v685, %v685
        %v702 = vmul.f32 %v686, %v686
        %v703 = vmul.f32 %v687, %v687
        %v704 = vmul.f32 %v688, %v688
        %v705 = vmul.f32 %v689, %v689
        %v706 = vmul.f32 %v690, %v690
        %v707 = vmul.f32 %v691, %v691
        %v708 = vmul.f32 %v692, %v692
        %vm709 = vcmask 523264
        %v710 = vsel %vm709, %v693, 0.0
        %v711 = vsel %vm709, %v694, 0.0
        %v712 = vadd.f32 %v710, %v711
        %v713 = vsel %vm709, %v695, 0.0
        %v714 = vadd.f32 %v712, %v713
        %v715 = vsel %vm709, %v696, 0.0
        %v716 = vadd.f32 %v714, %v715
        %v717 = vsel %vm709, %v697, 0.0
        %v718 = vadd.f32 %v716, %v717
        %v719 = vsel %vm709, %v698, 0.0
        %v720 = vadd.f32 %v718, %v719
        %v721 = vsel %vm709, %v699, 0.0
        %v722 = vadd.f32 %v720, %v721
        %v723 = vsel %vm709, %v700, 0.0
        %v724 = vadd.f32 %v722, %v723
        %v725 = vsel %vm709, %v701, 0.0
        %v726 = vadd.f32 %v724, %v725
        %v727 = vsel %vm709, %v702, 0.0
        %v728 = vadd.f32 %v726, %v727
        %v729 = vsel %vm709, %v703, 0.0
        %v730 = vadd.f32 %v728, %v729
        %v731 = vsel %vm709, %v704, 0.0
        %v732 = vadd.f32 %v730, %v731
        %v733 = vsel %vm709, %v705, 0.0
        %v734 = vadd.f32 %v732, %v733
        %v735 = vsel %vm709, %v706, 0.0
        %v736 = vadd.f32 %v734, %v735
        %v737 = vsel %vm709, %v707, 0.0
        %v738 = vadd.f32 %v736, %v737
        %v739 = vsel %vm709, %v708, 0.0
        %v740 = vadd.f32 %v738, %v739
        %741 = vadd.xlane.f32.xlu0 %v740
        %v742 = vpop.xlane.xlu0 %741
        %v743 = vrot.slane %v742, 4
        %v744 = vadd.f32 %v742, %v743
        %v745 = vrot.slane %v744, 2
        %v746 = vadd.f32 %v744, %v745
        %v747 = vrot.slane %v746, 1
        %v748 = vadd.f32 %v746, %v747
        %s749 = vtos %v748
        %v750 = vstv %s749
        %751 = vst [vmem:[%s288] sm:$0xff] %v750
        %v752 = vpack.c.bf16 %v646, %v645
        %v753 = vpack.c.bf16 %v648, %v647
        %v754 = vpack.c.bf16 %v650, %v649
        %v755 = vpack.c.bf16 %v652, %v651
        %v756 = vpack.c.bf16 %v654, %v653
        %v757 = vpack.c.bf16 %v656, %v655
        %v758 = vpack.c.bf16 %v658, %v657
        %v759 = vpack.c.bf16 %v660, %v659
        %v760 = vpack.c.bf16 %v662, %v661
        %v761 = vpack.c.bf16 %v664, %v663
        %v762 = vpack.c.bf16 %v666, %v665
        %v763 = vpack.c.bf16 %v668, %v667
        %v764 = vpack.c.bf16 %v670, %v669
        %v765 = vpack.c.bf16 %v672, %v671
        %v766 = vpack.c.bf16 %v674, %v673
        %v767 = vpack.c.bf16 %v676, %v675
        %v784 = vunpack.c.l.b16 %v752
        %v785 = vunpack.c.h.b16 %v752
        %v786 = vunpack.c.l.b16 %v753
        %v787 = vunpack.c.h.b16 %v753
        %v788 = vunpack.c.l.b16 %v754
        %v789 = vunpack.c.h.b16 %v754
        %v790 = vunpack.c.l.b16 %v755
        %v791 = vunpack.c.h.b16 %v755
        %v792 = vunpack.c.l.b16 %v756
        %v793 = vunpack.c.h.b16 %v756
        %v794 = vunpack.c.l.b16 %v757
        %v795 = vunpack.c.h.b16 %v757
        %v796 = vunpack.c.l.b16 %v758
        %v797 = vunpack.c.h.b16 %v758
        %v798 = vunpack.c.l.b16 %v759
        %v799 = vunpack.c.h.b16 %v759
        %v800 = vunpack.c.l.b16 %v760
        %v801 = vunpack.c.h.b16 %v760
        %v802 = vunpack.c.l.b16 %v761
        %v803 = vunpack.c.h.b16 %v761
        %v804 = vunpack.c.l.b16 %v762
        %v805 = vunpack.c.h.b16 %v762
        %v806 = vunpack.c.l.b16 %v763
        %v807 = vunpack.c.h.b16 %v763
        %v808 = vunpack.c.l.b16 %v764
        %v809 = vunpack.c.h.b16 %v764
        %v810 = vunpack.c.l.b16 %v765
        %v811 = vunpack.c.h.b16 %v765
        %v812 = vunpack.c.l.b16 %v766
        %v813 = vunpack.c.h.b16 %v766
        %v814 = vunpack.c.l.b16 %v767
        %v815 = vunpack.c.h.b16 %v767
        %v816 = vpack.c.b16 %v784, %v784
        %v817 = vpack.c.b16 %v785, %v785
        %v818 = vpack.c.b16 %v786, %v786
        %v819 = vpack.c.b16 %v787, %v787
        %v820 = vpack.c.b16 %v788, %v788
        %v821 = vpack.c.b16 %v789, %v789
        %v822 = vpack.c.b16 %v790, %v790
        %v823 = vpack.c.b16 %v791, %v791
        %v824 = vpack.c.b16 %v792, %v792
        %v825 = vpack.c.b16 %v793, %v793
        %v826 = vpack.c.b16 %v794, %v794
        %v827 = vpack.c.b16 %v795, %v795
        %v828 = vpack.c.b16 %v796, %v796
        %v829 = vpack.c.b16 %v797, %v797
        %v830 = vpack.c.b16 %v798, %v798
        %v831 = vpack.c.b16 %v799, %v799
        %v832 = vpack.c.b16 %v800, %v800
        %v833 = vpack.c.b16 %v801, %v801
        %v834 = vpack.c.b16 %v802, %v802
        %v835 = vpack.c.b16 %v803, %v803
        %v836 = vpack.c.b16 %v804, %v804
        %v837 = vpack.c.b16 %v805, %v805
        %v838 = vpack.c.b16 %v806, %v806
        %v839 = vpack.c.b16 %v807, %v807
        %v840 = vpack.c.b16 %v808, %v808
        %v841 = vpack.c.b16 %v809, %v809
        %v842 = vpack.c.b16 %v810, %v810
        %v843 = vpack.c.b16 %v811, %v811
        %v844 = vpack.c.b16 %v812, %v812
        %v845 = vpack.c.b16 %v813, %v813
        %v846 = vpack.c.b16 %v814, %v814
        %v847 = vpack.c.b16 %v815, %v815
        %vm880 = vcmask 519168
        %881 = vst.msk [vmem:[%s281] sm:$0xf] %vm880, %v816
        %882 = vst.msk [vmem:[%s281 + $0x4] sm:$0xf] %vm880, %v817
        %883 = vst.msk [vmem:[%s281 + $0x8] sm:$0xf] %vm880, %v818
        %884 = vst.msk [vmem:[%s281 + $0xc] sm:$0xf] %vm880, %v819
        %885 = vst.msk [vmem:[%s281 + $0x10] sm:$0xf] %vm880, %v820
        %886 = vst.msk [vmem:[%s281 + $0x14] sm:$0xf] %vm880, %v821
        %887 = vst.msk [vmem:[%s281 + $0x18] sm:$0xf] %vm880, %v822
        %888 = vst.msk [vmem:[%s281 + $0x1c] sm:$0xf] %vm880, %v823
        %889 = vst.msk [vmem:[%s281 + $0x20] sm:$0xf] %vm880, %v824
        %890 = vst.msk [vmem:[%s281 + $0x24] sm:$0xf] %vm880, %v825
        %891 = vst.msk [vmem:[%s281 + $0x28] sm:$0xf] %vm880, %v826
        %892 = vst.msk [vmem:[%s281 + $0x2c] sm:$0xf] %vm880, %v827
        %893 = vst.msk [vmem:[%s281 + $0x30] sm:$0xf] %vm880, %v828
        %894 = vst.msk [vmem:[%s281 + $0x34] sm:$0xf] %vm880, %v829
        %895 = vst.msk [vmem:[%s281 + $0x38] sm:$0xf] %vm880, %v830
        %896 = vst.msk [vmem:[%s281 + $0x3c] sm:$0xf] %vm880, %v831
        %897 = vst.msk [vmem:[%s281 + $0x40] sm:$0xf] %vm880, %v832
        %898 = vst.msk [vmem:[%s281 + $0x44] sm:$0xf] %vm880, %v833
        %899 = vst.msk [vmem:[%s281 + $0x48] sm:$0xf] %vm880, %v834
        %900 = vst.msk [vmem:[%s281 + $0x4c] sm:$0xf] %vm880, %v835
        %901 = vst.msk [vmem:[%s281 + $0x50] sm:$0xf] %vm880, %v836
        %902 = vst.msk [vmem:[%s281 + $0x54] sm:$0xf] %vm880, %v837
        %903 = vst.msk [vmem:[%s281 + $0x58] sm:$0xf] %vm880, %v838
        %904 = vst.msk [vmem:[%s281 + $0x5c] sm:$0xf] %vm880, %v839
        %905 = vst.msk [vmem:[%s281 + $0x60] sm:$0xf] %vm880, %v840
        %906 = vst.msk [vmem:[%s281 + $0x64] sm:$0xf] %vm880, %v841
        %907 = vst.msk [vmem:[%s281 + $0x68] sm:$0xf] %vm880, %v842
        %908 = vst.msk [vmem:[%s281 + $0x6c] sm:$0xf] %vm880, %v843
        %909 = vst.msk [vmem:[%s281 + $0x70] sm:$0xf] %vm880, %v844
        %910 = vst.msk [vmem:[%s281 + $0x74] sm:$0xf] %vm880, %v845
        %911 = vst.msk [vmem:[%s281 + $0x78] sm:$0xf] %vm880, %v846
        %912 = vst.msk [vmem:[%s281 + $0x7c] sm:$0xf] %vm880, %v847
        %s913 = sand.u32 %s118, 1
        %s914 = scalar_lea.sflag [#allocation5], %s913
        %s915 = sand.u32 %s118, 1
        %s916 = smul.addr %s915, 128
        %s917 = scalar_lea.vmem [#allocation8], %s916
        %s918 = sand.u32 %s146, 1
        %s919 = scalar_lea.sflag [#allocation10], %s918
        %s920 = sand.u32 %s146, 1
        %s921 = smul.addr %s920, 8
        %s922 = scalar_lea.vmem [#allocation9], %s921
        // Predicated region
        $region41: #{tpu_custom_call.1} parent=31 // pred_check
          %p923 = pneg %p128
        $region42: #{tpu_custom_call.1} parent=31 // pred_check_branch
          %925 = sbr.rel (%p923) target = $region44
        $region43: #{tpu_custom_call.1} parent=31 // pred_region
          #allocation14 [shape = 'u32[6]{0}', space=smem, size = 0x18, scoped, tag = 'DMA stride descriptor']
          %s926 = smul.u32 2, %s30
          %s927 = smul.u32 8, %s31
          %s929 = ssub.s32 2048, 2048
          %930 = vsyncadd %s914, %s929
          %s931 = smul.addr %s927, 2
          %s932 = smul.addr %s926, 32
          %s933 = sadd.s32 %s931, %s932
          %s934 = smul.addr %s933, 64
          %s935 = scalar_lea.hbm %s3, %s934
          %s937 = sshll.u32 1, 14
          %s938 = sxor.u32 4294967295, %s937
          %s941 = sshll.u32 7, 18
          %s942 = sxor.u32 4294967295, %s941
          %s943 = sand.u32 0, %s942
          %s945 = sor.u32 %s943, 0
          %s946 = sshll.u32 %s917, 4
          %s947 = int_to_ptr.vmem [resolvable:$true] %s946
          %953 = sst [smem:[#allocation14]] 1024
          %s954 = scalar_lea.smem [#allocation14], 1
          %955 = sst [smem:[%s954]] 2048
          %s956 = scalar_lea.smem [#allocation14], 2
          %957 = sst [smem:[%s956]] 16
          %s958 = scalar_lea.smem [#allocation14], 3
          %959 = sst [smem:[%s958]] 64
          %s960 = scalar_lea.smem [#allocation14], 4
          %961 = sst [smem:[%s960]] 64
          %s962 = scalar_lea.smem [#allocation14], 5
          %963 = sst [smem:[%s962]] 4
          %965 = dma.general %s947, 2048, %s935, %s914, 131072, [#allocation14], %s945, 0
        $region44: #{tpu_custom_call.1} parent=31 // pred_fallthru
          _
        // Predicated region
        $region45: #{tpu_custom_call.1} parent=31 // pred_check
          %p966 = pneg %p156
        $region46: #{tpu_custom_call.1} parent=31 // pred_check_branch
          %968 = sbr.rel (%p966) target = $region48
        $region47: #{tpu_custom_call.1} parent=31 // pred_region
          %s970 = ssub.s32 128, 128
          %971 = vsyncadd %s919, %s970
          %s972 = smul.addr %s30, 2
          %s973 = sadd.s32 %s31, %s972
          %s974 = smul.addr %s973, 128
          %s975 = scalar_lea.hbm %s4, %s974
          %s977 = sshll.u32 %s922, 4
          %s978 = int_to_ptr.vmem [resolvable:$true] %s977
          %980 = dma.vmem_to_hbm [thread:$0]  %s978, 128, %s975, %s919
        $region48: #{tpu_custom_call.1} parent=31 // pred_fallthru
          _
      $region32: #{tpu_custom_call.1} parent=5 // pred_fallthru
        _
      %p981 = scmp.le.s32.totalorder 2, %s21
      // Predicated region
      $region49: #{tpu_custom_call.1} parent=5 // pred_check
        %p982 = pneg %p981
      $region50: #{tpu_custom_call.1} parent=5 // pred_check_branch
        %984 = sbr.rel (%p982) target = $region52
      $region51: #{tpu_custom_call.1} parent=5 // pred_region
        %s985 = ssub.s32 %s21, 2
        // Predicated region
        $region53: #{tpu_custom_call.1} parent=51 // pred_check
          %p986 = pneg %p134
        $region54: #{tpu_custom_call.1} parent=51 // pred_check_branch
          %988 = sbr.rel (%p986) target = $region56
        $region55: #{tpu_custom_call.1} parent=51 // pred_region
          %s989 = sand.u32 %s119, 1
          %s990 = scalar_lea.sflag [#allocation5], %s989
          %s991 = sand.u32 %s119, 1
          %s992 = smul.addr %s991, 128
          %s993 = scalar_lea.vmem [#allocation8], %s992
          %994 = dma.done %s990, 2048
        $region56: #{tpu_custom_call.1} parent=51 // pred_fallthru
          _
        // Predicated region
        $region57: #{tpu_custom_call.1} parent=51 // pred_check
          %p995 = pneg %p162
        $region58: #{tpu_custom_call.1} parent=51 // pred_check_branch
          %997 = sbr.rel (%p995) target = $region60
        $region59: #{tpu_custom_call.1} parent=51 // pred_region
          %s998 = sand.u32 %s147, 1
          %s999 = scalar_lea.sflag [#allocation10], %s998
          %s1000 = sand.u32 %s147, 1
          %s1001 = smul.addr %s1000, 8
          %s1002 = scalar_lea.vmem [#allocation9], %s1001
          %1003 = dma.done %s999, 128
        $region60: #{tpu_custom_call.1} parent=51 // pred_fallthru
          _
      $region52: #{tpu_custom_call.1} parent=5 // pred_fallthru
        _
    $region6: #{tpu_custom_call.1} parent=1 // loop_footer
      %s25 = sadd.s32 1, %s21
    $region7: #{tpu_custom_call.1} parent=1 // loop_footer_branch
      %20 = sbr.rel target = $region3
    $region8: #{tpu_custom_call.1} parent=1 // loop_exit
      _
    %1004 = vsyncpa [#allocation4], 1
    %s1005 = scalar_lea.sflag [#allocation4], 1
    %1006 = vsyncpa %s1005, 1
    %1007 = vsyncpa [#allocation7], 1
    %1008 = vsyncpa [#allocation5], 1
    %s1009 = scalar_lea.sflag [#allocation5], 1
    %1010 = vsyncpa %s1009, 1
    %1011 = vsyncpa [#allocation10], 1
    %s1012 = scalar_lea.sflag [#allocation10], 1
    %1013 = vsyncpa %s1012, 1

</llo_original>
